<compile_context>
chip_gen: v5e
topology: v5e:2x2
jax: 0.10.0
libtpu: 0.0.40
codegen_flags: <defaults>
</compile_context>

<pallas_src>
import functools

import jax
import jax.numpy as jnp
import numpy as np
from jax import lax
from jax.experimental import pallas as pl
from jax.experimental.pallas import tpu as pltpu

HIDDEN = 64        # logical hidden width of the torch module
HIDDEN_PAD = 128   # padded to a full lane width
OUT_PAD = 128      # fused/padded head output width (needs 2 * n_actions <= 128)
MAX_B_TILE = 256   # cap batch tile to limit vreg pressure


def _round_up(n, m):
    return ((n + m - 1) // m) * m


def _policy_kernel(x_ref, w1_ref, b1_ref, wh_ref, bh_ref, out_ref, *, n_actions):
    # hidden = relu(x @ W1 + b1), f32 accumulate, f32 elementwise
    x = x_ref[...]
    h = jnp.dot(x, w1_ref[...], preferred_element_type=jnp.float32) + b1_ref[...]
    h = jnp.maximum(h, 0.0)
    if wh_ref.dtype != jnp.float32:
        h = h.astype(wh_ref.dtype)   # bf16 MXU operand path (accumulate stays f32)

    # fused heads: z[:, :A] = mean, z[:, A:2A] = sigma pre-activation
    z = jnp.dot(h, wh_ref[...], preferred_element_type=jnp.float32) + bh_ref[...]

    # softplus only on the sigma columns (torch-style threshold=20 stable form)
    col = lax.broadcasted_iota(jnp.int32, z.shape, 1)
    is_sigma = (col >= n_actions) & (col < 2 * n_actions)
    sp = jnp.where(z > 20.0, z, jnp.log1p(jnp.exp(jnp.minimum(z, 20.0))))
    out_ref[...] = jnp.where(is_sigma, sp, z).astype(out_ref.dtype)


def pack_policy_params(params, *, use_bf16=False):
    """Fuse mean|sigma heads, zero-pad hidden->128 and head-out->128."""
    w1, b1 = params["w1"], params["b1"]
    wm, bm = params["wm"], params["bm"]
    ws, bs = params["ws"], params["bs"]
    D, H = w1.shape
    A = wm.shape[1]
    assert H <= HIDDEN_PAD and 2 * A <= OUT_PAD
    wdt = jnp.bfloat16 if use_bf16 else jnp.float32

    w1_p = jnp.zeros((D, HIDDEN_PAD), jnp.float32).at[:, :H].set(w1).astype(wdt)
    b1_p = jnp.zeros((1, HIDDEN_PAD), jnp.float32).at[:, :H].set(b1.reshape(1, -1))
    wh_p = (jnp.zeros((HIDDEN_PAD, OUT_PAD), jnp.float32)
            .at[:H, :A].set(wm)
            .at[:H, A:2 * A].set(ws)
            .astype(wdt))
    bh_p = (jnp.zeros((1, OUT_PAD), jnp.float32)
            .at[:, :A].set(bm.reshape(1, -1))
            .at[:, A:2 * A].set(bs.reshape(1, -1)))
    return {"w1": w1_p, "b1": b1_p, "wh": wh_p, "bh": bh_p,
            "n_actions": A, "in_dtype": wdt}


def policy_forward(x, params, *, use_bf16=False):
    """x: [B, n_state_dims] float32. Returns (mean, sigma), each [B, n_actions]."""
    p = pack_policy_params(params, use_bf16=use_bf16)
    A = p["n_actions"]
    B, D = x.shape

    b_tile = min(MAX_B_TILE, _round_up(B, 8))
    b_pad = _round_up(B, b_tile)
    x_p = x if b_pad == B else jnp.pad(x, ((0, b_pad - B), (0, 0)))
    x_p = x_p.astype(p["in_dtype"])

    grid = (b_pad // b_tile,)
    kernel = functools.partial(_policy_kernel, n_actions=A)

    out = pl.pallas_call(
        kernel,
        out_shape=jax.ShapeDtypeStruct((b_pad, OUT_PAD), jnp.float32),
        grid=grid,
        in_specs=[
            pl.BlockSpec((b_tile, D), lambda i: (i, 0)),               # x tile
            pl.BlockSpec((D, HIDDEN_PAD), lambda i: (0, 0)),           # W1
            pl.BlockSpec((1, HIDDEN_PAD), lambda i: (0, 0)),           # b1
            pl.BlockSpec((HIDDEN_PAD, OUT_PAD), lambda i: (0, 0)),     # fused heads W
            pl.BlockSpec((1, OUT_PAD), lambda i: (0, 0)),              # fused heads b
        ],
        out_specs=pl.BlockSpec((b_tile, OUT_PAD), lambda i: (i, 0)),
        compiler_params=pltpu.CompilerParams(
            dimension_semantics=("parallel",)),
    )(x_p, p["w1"], p["b1"], p["wh"], p["bh"])

    mean = out[:B, :A]
    sigma = out[:B, A:2 * A]
    return mean, sigma


def init_policy_params(key, n_state_dims, n_actions, hidden=HIDDEN):
    """Mirrors initialize_params: xavier_uniform weights, biases = 0.001.
    Weights stored as [in, out] (transpose of torch's [out, in])."""
    k1, k2, k3 = jax.random.split(key, 3)

    def xavier(k, fan_in, fan_out):
        limit = np.sqrt(6.0 / (fan_in + fan_out))
        return jax.random.uniform(k, (fan_in, fan_out), jnp.float32, -limit, limit)

    return {
        "w1": xavier(k1, n_state_dims, hidden),
        "b1": jnp.full((1, hidden), 0.001, jnp.float32),
        "wm": xavier(k2, hidden, n_actions),
        "bm": jnp.full((1, n_actions), 0.001, jnp.float32),
        "ws": xavier(k3, hidden, n_actions),
        "bs": jnp.full((1, n_actions), 0.001, jnp.float32),
    }


def policy_forward_ref(x, p):
    h = jnp.maximum(x @ p["w1"] + p["b1"], 0.0)
    mean = h @ p["wm"] + p["bm"]
    sigma = jax.nn.softplus(h @ p["ws"] + p["bs"])
    return mean, sigma


if __name__ == "__main__":
    key = jax.random.PRNGKey(0)
    kx, kp, kx2 = jax.random.split(key, 3)

    n_state_dims, n_actions, batch = 8, 4, 8
    x = jax.random.normal(kx, (batch, n_state_dims), jnp.float32)
    params = init_policy_params(kp, n_state_dims, n_actions)

    # Small-batch check (single grid step).
    mean, sigma = policy_forward(x, params)
    jax.block_until_ready((mean, sigma))
    mean_ref, sigma_ref = policy_forward_ref(x, params)
    np.testing.assert_allclose(np.asarray(mean), np.asarray(mean_ref),
                               rtol=1e-5, atol=1e-5)
    np.testing.assert_allclose(np.asarray(sigma), np.asarray(sigma_ref),
                               rtol=1e-5, atol=1e-5)

    # Larger, non-tile-multiple batch: exercises the batch grid + padding path.
    x_big = jax.random.normal(kx2, (300, n_state_dims), jnp.float32)
    mean_b, sigma_b = policy_forward(x_big, params)
    jax.block_until_ready((mean_b, sigma_b))
    mean_b_ref, sigma_b_ref = policy_forward_ref(x_big, params)
    np.testing.assert_allclose(np.asarray(mean_b), np.asarray(mean_b_ref),
                               rtol=1e-5, atol=1e-5)
    np.testing.assert_allclose(np.asarray(sigma_b), np.asarray(sigma_b_ref),
                               rtol=1e-5, atol=1e-5)

    print("KERNEL_OK")
</pallas_src>

<mosaic_0001>
module attributes {stable_mosaic.version = 11 : i64} {
  func.func @_policy_kernel(%arg0: i32, %arg1: memref<8x8xf32, #tpu.memory_space<vmem>>, %arg2: memref<8x128xf32, #tpu.memory_space<vmem>>, %arg3: memref<1x128xf32, #tpu.memory_space<vmem>>, %arg4: memref<128x128xf32, #tpu.memory_space<vmem>>, %arg5: memref<1x128xf32, #tpu.memory_space<vmem>>, %arg6: memref<8x128xf32, #tpu.memory_space<vmem>>) attributes {dimension_semantics = [#tpu.dimension_semantics<parallel>], iteration_bounds = array<i64: 1>, scalar_prefetch = 0 : i64, scratch_operands = 0 : i64, tpu.core_type = #tpu.core_type<tc>, window_params = [{transform_indices = @transform_0, window_bounds = array<i64: 8, 8>}, {pipeline_mode = #tpu.pipeline_mode<synchronous>, transform_indices = @transform_1, window_bounds = array<i64: 8, 128>}, {pipeline_mode = #tpu.pipeline_mode<synchronous>, transform_indices = @transform_2, window_bounds = array<i64: 1, 128>}, {pipeline_mode = #tpu.pipeline_mode<synchronous>, transform_indices = @transform_3, window_bounds = array<i64: 128, 128>}, {pipeline_mode = #tpu.pipeline_mode<synchronous>, transform_indices = @transform_4, window_bounds = array<i64: 1, 128>}, {transform_indices = @transform_5, window_bounds = array<i64: 8, 128>}]} {
    %c0 = arith.constant 0 : index
    %c0_0 = arith.constant 0 : index
    %0 = vector.load %arg1[%c0, %c0_0] : memref<8x8xf32, #tpu.memory_space<vmem>>, vector<8x8xf32>
    %c0_1 = arith.constant 0 : index
    %c0_2 = arith.constant 0 : index
    %1 = vector.load %arg2[%c0_1, %c0_2] : memref<8x128xf32, #tpu.memory_space<vmem>>, vector<8x128xf32>
    %cst = arith.constant dense<0.000000e+00> : vector<8x128xf32>
    %2 = tpu.matmul %0, %1, %cst {dimension_numbers = #tpu.dot_dimension_numbers<[1], [0], [0], [1], [0, 0, 1, 1], [], []>} : vector<8x8xf32>, vector<8x128xf32>, vector<8x128xf32> -> vector<8x128xf32>
    %c0_3 = arith.constant 0 : index
    %c0_4 = arith.constant 0 : index
    %3 = vector.load %arg3[%c0_3, %c0_4] : memref<1x128xf32, #tpu.memory_space<vmem>>, vector<1x128xf32>
    %4 = vector.broadcast %3 : vector<1x128xf32> to vector<8x128xf32>
    %5 = arith.addf %2, %4 : vector<8x128xf32>
    %cst_5 = arith.constant 0.000000e+00 : f32
    %6 = vector.broadcast %cst_5 : f32 to vector<8x128xf32>
    %7 = arith.maximumf %5, %6 : vector<8x128xf32>
    %c0_6 = arith.constant 0 : index
    %c0_7 = arith.constant 0 : index
    %8 = vector.load %arg4[%c0_6, %c0_7] : memref<128x128xf32, #tpu.memory_space<vmem>>, vector<128x128xf32>
    %cst_8 = arith.constant dense<0.000000e+00> : vector<8x128xf32>
    %9 = tpu.matmul %7, %8, %cst_8 {dimension_numbers = #tpu.dot_dimension_numbers<[1], [0], [0], [1], [0, 0, 1, 1], [], []>} : vector<8x128xf32>, vector<128x128xf32>, vector<8x128xf32> -> vector<8x128xf32>
    %c0_9 = arith.constant 0 : index
    %c0_10 = arith.constant 0 : index
    %10 = vector.load %arg5[%c0_9, %c0_10] : memref<1x128xf32, #tpu.memory_space<vmem>>, vector<1x128xf32>
    %11 = vector.broadcast %10 : vector<1x128xf32> to vector<8x128xf32>
    %12 = arith.addf %9, %11 : vector<8x128xf32>
    %13 = tpu.iota {dimensions = array<i32: 1>} : vector<8x128xi32>
    %c4_i32 = arith.constant 4 : i32
    %14 = vector.broadcast %c4_i32 : i32 to vector<8x128xi32>
    %15 = arith.cmpi sge, %13, %14 : vector<8x128xi32>
    %c8_i32 = arith.constant 8 : i32
    %16 = vector.broadcast %c8_i32 : i32 to vector<8x128xi32>
    %17 = arith.cmpi slt, %13, %16 : vector<8x128xi32>
    %18 = arith.andi %15, %17 : vector<8x128xi1>
    %cst_11 = arith.constant 2.000000e+01 : f32
    %19 = vector.broadcast %cst_11 : f32 to vector<8x128xf32>
    %20 = arith.cmpf ogt, %12, %19 : vector<8x128xf32>
    %cst_12 = arith.constant 2.000000e+01 : f32
    %21 = vector.broadcast %cst_12 : f32 to vector<8x128xf32>
    %22 = arith.minimumf %12, %21 : vector<8x128xf32>
    %23 = math.exp %22 : vector<8x128xf32>
    %24 = math.log1p %23 : vector<8x128xf32>
    %25 = arith.select %20, %12, %24 : vector<8x128xi1>, vector<8x128xf32>
    %26 = arith.select %18, %25, %12 : vector<8x128xi1>, vector<8x128xf32>
    %c0_13 = arith.constant 0 : index
    %c0_14 = arith.constant 0 : index
    %27 = vector.load %arg6[%c0_13, %c0_14] : memref<8x128xf32, #tpu.memory_space<vmem>>, vector<8x128xf32>
    tpu.vector_store %arg6[%c0_13, %c0_14], %26 {strides = array<i32>} : memref<8x128xf32, #tpu.memory_space<vmem>>, vector<8x128xf32>,
    return
  }
  func.func @transform_0(%arg0: i32) -> (i32, i32) {
    %c0_i32 = arith.constant 0 : i32
    %c0_i32_0 = arith.constant 0 : i32
    return %arg0, %c0_i32 : i32, i32
  }
  func.func @transform_1(%arg0: i32) -> (i32, i32) {
    %c0_i32 = arith.constant 0 : i32
    %c0_i32_0 = arith.constant 0 : i32
    %c0_i32_1 = arith.constant 0 : i32
    return %c0_i32, %c0_i32_0 : i32, i32
  }
  func.func @transform_2(%arg0: i32) -> (i32, i32) {
    %c0_i32 = arith.constant 0 : i32
    %c0_i32_0 = arith.constant 0 : i32
    %c0_i32_1 = arith.constant 0 : i32
    return %c0_i32, %c0_i32_0 : i32, i32
  }
  func.func @transform_3(%arg0: i32) -> (i32, i32) {
    %c0_i32 = arith.constant 0 : i32
    %c0_i32_0 = arith.constant 0 : i32
    %c0_i32_1 = arith.constant 0 : i32
    return %c0_i32, %c0_i32_0 : i32, i32
  }
  func.func @transform_4(%arg0: i32) -> (i32, i32) {
    %c0_i32 = arith.constant 0 : i32
    %c0_i32_0 = arith.constant 0 : i32
    %c0_i32_1 = arith.constant 0 : i32
    return %c0_i32, %c0_i32_0 : i32, i32
  }
  func.func @transform_5(%arg0: i32) -> (i32, i32) {
    %c0_i32 = arith.constant 0 : i32
    %c0_i32_0 = arith.constant 0 : i32
    return %arg0, %c0_i32 : i32, i32
  }
}

</mosaic_0001>

<llo_original>
// kernel: tpu_custom_call.1
$region0: #{tpu_custom_call.1}
  #allocation0 [shape = 'u32[]', space=smem, size = 0x4, offset = 0x4, fixed_abs, tag = 'smem constant byte address 0x4 - core index']
  #allocation1 [shape = 'u32[72,128]{1,0:T(1,128)}', space=vmem, size = 0x9000, scoped, tag = 'internal scratch']
  %s0 = inlined_call_operand.hbm [shape: f32[8,8], index: 0, kind: input, shape index: {}]
  %s1 = inlined_call_operand.hbm [shape: f32[8,128], index: 1, kind: input, shape index: {}]
  %s2 = inlined_call_operand.vmem [shape: f32[1,128], index: 2, kind: input, shape index: {}]
  %s3 = inlined_call_operand.hbm [shape: f32[128,128], index: 3, kind: input, shape index: {}]
  %s4 = inlined_call_operand.vmem [shape: f32[1,128], index: 4, kind: input, shape index: {}]
  %s5 = inlined_call_operand.hbm [shape: f32[8,128], index: 5, kind: output, shape index: {}]
  %s6 = sld [smem:[#allocation0]]
  $region42: #{tpu_custom_call.1} parent=0
    _
  %s8 = ssub.s32 1, %s6
  %s9 = scalar_select 0, %s8, %s6
  $region1: #{tpu_custom_call.1} parent=0
    #allocation2 [shape = 'u8[4096]{0}', space=vmem, size = 0x1000, scoped, tag = 'input window, operand 0, single buffered']
    #allocation3 [shape = 's32[1]{0}', space=sflag, size = 0x4, scoped, tag = 'scoped memory for tpu_custom_call.1']
    #allocation4 [shape = 's32[1]{0}', space=sflag, size = 0x4, scoped, tag = 'scoped memory for tpu_custom_call.1']
    #allocation5 [shape = 'u8[4096]{0}', space=vmem, size = 0x1000, scoped, tag = 'input window, operand 1, single buffered']
    #allocation6 [shape = 's32[1]{0}', space=sflag, size = 0x4, scoped, tag = 'scoped memory for tpu_custom_call.1']
    #allocation7 [shape = 'u8[65536]{0}', space=vmem, size = 0x10000, scoped, tag = 'input window, operand 3, single buffered']
    #allocation8 [shape = 'u8[4096]{0}', space=vmem, size = 0x1000, scoped, tag = 'output window, operand 0, single buffered']
    %10 = vsyncpa [#allocation3], 0
    %11 = vsyncpa [#allocation6], 0
    %12 = vsyncpa [#allocation4], 0
    // Predicated region
    $region2: #{tpu_custom_call.1} parent=1 // pred_check
      _
    $region3: #{tpu_custom_call.1} parent=1 // pred_check_branch
      %14 = sbr.rel (0) target = $region5
    $region4: #{tpu_custom_call.1} parent=1 // pred_region
      %16 = vsyncadd [#allocation3], 0
      %s18 = sshll.u32 %s0, 4
      %s19 = int_to_ptr.hbm [resolvable:$true] %s18
      %s20 = sshll.u32 [#allocation2], 4
      %s21 = int_to_ptr.vmem [resolvable:$true] %s20
      %23 = dma.hbm_to_vmem [thread:$0]  %s19, 128, %s21, [#allocation3]
    $region5: #{tpu_custom_call.1} parent=1 // pred_fallthru
      _
    // Predicated region
    $region6: #{tpu_custom_call.1} parent=1 // pred_check
      _
    $region7: #{tpu_custom_call.1} parent=1 // pred_check_branch
      %25 = sbr.rel (0) target = $region9
    $region8: #{tpu_custom_call.1} parent=1 // pred_region
      %27 = vsyncadd [#allocation6], 0
      %s29 = sshll.u32 %s1, 4
      %s30 = int_to_ptr.hbm [resolvable:$true] %s29
      %s31 = sshll.u32 [#allocation5], 4
      %s32 = int_to_ptr.vmem [resolvable:$true] %s31
      %34 = dma.hbm_to_vmem [thread:$0]  %s30, 128, %s32, [#allocation6]
    $region9: #{tpu_custom_call.1} parent=1 // pred_fallthru
      _
    // Predicated region
    $region10: #{tpu_custom_call.1} parent=1 // pred_check
      _
    $region11: #{tpu_custom_call.1} parent=1 // pred_check_branch
      %36 = sbr.rel (0) target = $region13
    $region12: #{tpu_custom_call.1} parent=1 // pred_region
      _
    $region13: #{tpu_custom_call.1} parent=1 // pred_fallthru
      _
    // Predicated region
    $region14: #{tpu_custom_call.1} parent=1 // pred_check
      _
    $region15: #{tpu_custom_call.1} parent=1 // pred_check_branch
      %38 = sbr.rel (0) target = $region17
    $region16: #{tpu_custom_call.1} parent=1 // pred_region
      %40 = vsyncadd [#allocation6], 0
      %s41 = sshll.u32 %s3, 4
      %s42 = int_to_ptr.hbm [resolvable:$true] %s41
      %s43 = sshll.u32 [#allocation7], 4
      %s44 = int_to_ptr.vmem [resolvable:$true] %s43
      %49 = dma.hbm_to_vmem [thread:$0]  %s42, 2048, %s44, [#allocation6], 128, 128, 8
    $region17: #{tpu_custom_call.1} parent=1 // pred_fallthru
      _
    // Predicated region
    $region18: #{tpu_custom_call.1} parent=1 // pred_check
      _
    $region19: #{tpu_custom_call.1} parent=1 // pred_check_branch
      %51 = sbr.rel (0) target = $region21
    $region20: #{tpu_custom_call.1} parent=1 // pred_region
      _
    $region21: #{tpu_custom_call.1} parent=1 // pred_fallthru
      _
    // Predicated region
    $region22: #{tpu_custom_call.1} parent=1 // pred_check
      _
    $region23: #{tpu_custom_call.1} parent=1 // pred_check_branch
      %53 = sbr.rel (0) target = $region25
    $region24: #{tpu_custom_call.1} parent=1 // pred_region
      %55 = dma.done [#allocation3], 128
    $region25: #{tpu_custom_call.1} parent=1 // pred_fallthru
      _
    // Predicated region
    $region26: #{tpu_custom_call.1} parent=1 // pred_check
      _
    $region27: #{tpu_custom_call.1} parent=1 // pred_check_branch
      %57 = sbr.rel (0) target = $region29
    $region28: #{tpu_custom_call.1} parent=1 // pred_region
      %59 = dma.done [#allocation6], 128
    $region29: #{tpu_custom_call.1} parent=1 // pred_fallthru
      _
    // Predicated region
    $region30: #{tpu_custom_call.1} parent=1 // pred_check
      _
    $region31: #{tpu_custom_call.1} parent=1 // pred_check_branch
      %61 = sbr.rel (0) target = $region33
    $region32: #{tpu_custom_call.1} parent=1 // pred_region
      %63 = dma.done [#allocation6], 2048
    $region33: #{tpu_custom_call.1} parent=1 // pred_fallthru
      _
    %v64 = vld [vmem:[#allocation2] sm:$0xff]
    %v65 = vld [vmem:[#allocation5] sm:$0xff]
    %v66 = vld [vmem:[%s2] sm:$0x1]
    %v68 = vperm.slane %v66, 0
    %vm70 = vcmask 64512
    %v72 = vsel %vm70, %v64, 0
    %74 = vmatpush.msra.mxu0 0.0
    %75 = vmatpush.msra.mxu0 0.0
    %76 = vmatpush.msra.mxu0 0.0
    %77 = vmatpush.msra.mxu0 0.0
    %78 = vmatpush.msra.mxu0 0.0
    %79 = vmatpush.msra.mxu0 0.0
    %80 = vmatpush.msra.mxu0 0.0
    %81 = vmatpush.msra.mxu0 0.0
    %82 = vmatpush.msra.mxu0 0.0
    %83 = vmatpush.msra.mxu0 0.0
    %84 = vmatpush.msra.mxu0 0.0
    %85 = vmatpush.msra.mxu0 0.0
    %86 = vmatpush.msra.mxu0 0.0
    %87 = vmatpush.msra.mxu0 0.0
    %88 = vmatpush.msra.mxu0 0.0
    %89 = vmatpush.msra.mxu0 %v65
    %90 = vmatmul.f32.gmra.mxu0 %v72
    %v91 = vpop.f32.mrf.mxu0
    %v92 = vadd.f32 %v68, %v91
    %93 = vdwg.mxu0
    %v94 = vmax.f32 %v92, 0.0
    %v95 = vld [vmem:[#allocation7] sm:$0xff]
    %v96 = vld [vmem:[#allocation7 + $0x8] sm:$0xff]
    %v97 = vld [vmem:[#allocation7 + $0x10] sm:$0xff]
    %v98 = vld [vmem:[#allocation7 + $0x18] sm:$0xff]
    %v99 = vld [vmem:[#allocation7 + $0x20] sm:$0xff]
    %v100 = vld [vmem:[#allocation7 + $0x28] sm:$0xff]
    %v101 = vld [vmem:[#allocation7 + $0x30] sm:$0xff]
    %v102 = vld [vmem:[#allocation7 + $0x38] sm:$0xff]
    %v103 = vld [vmem:[#allocation7 + $0x40] sm:$0xff]
    %v104 = vld [vmem:[#allocation7 + $0x48] sm:$0xff]
    %v105 = vld [vmem:[#allocation7 + $0x50] sm:$0xff]
    %v106 = vld [vmem:[#allocation7 + $0x58] sm:$0xff]
    %v107 = vld [vmem:[#allocation7 + $0x60] sm:$0xff]
    %v108 = vld [vmem:[#allocation7 + $0x68] sm:$0xff]
    %v109 = vld [vmem:[#allocation7 + $0x70] sm:$0xff]
    %v110 = vld [vmem:[#allocation7 + $0x78] sm:$0xff]
    %v111 = vld [vmem:[%s4] sm:$0x1]
    %v113 = vperm.slane %v111, 0
    %115 = vmatpush.msra.mxu0 %v110
    %116 = vmatpush.msra.mxu0 %v109
    %117 = vmatpush.msra.mxu0 %v108
    %118 = vmatpush.msra.mxu0 %v107
    %119 = vmatpush.msra.mxu0 %v106
    %120 = vmatpush.msra.mxu0 %v105
    %121 = vmatpush.msra.mxu0 %v104
    %122 = vmatpush.msra.mxu0 %v103
    %123 = vmatpush.msra.mxu0 %v102
    %124 = vmatpush.msra.mxu0 %v101
    %125 = vmatpush.msra.mxu0 %v100
    %126 = vmatpush.msra.mxu0 %v99
    %127 = vmatpush.msra.mxu0 %v98
    %128 = vmatpush.msra.mxu0 %v97
    %129 = vmatpush.msra.mxu0 %v96
    %130 = vmatpush.msra.mxu0 %v95
    %131 = vmatmul.f32.gmra.mxu0 %v94
    %v132 = vpop.f32.mrf.mxu0
    %v133 = vadd.f32 %v113, %v132
    %134 = vdwg.mxu0
    %v135 = vlaneseq
    %v136 = vand.u32 %v135, 127
    %vm137 = vcmp.ge.s32.totalorder %v136, 4
    %vm138 = vcmp.lt.s32.totalorder %v136, 8
    %vm139 = vmand %vm137, %vm138
    %vm140 = vcmp.gt.f32.partialorder %v133, 20.0
    %v141 = vmin.f32 %v133, 20.0
    %v142 = vmul.f32 %v141, 1.442695
    %v143 = vpow.pop %v142
    %v144 = vadd.f32 %v143, 1.0
    %v145 = vlog2.pop %v144
    %v146 = vmul.f32 %v145, 0.6931472
    %v147 = vmul.f32 -0.5, %v143
    %v148 = vadd.f32 %v147, 1.0
    %v149 = vmul.f32 %v148, %v143
    %v150 = vand.u32 2147483647, %v143
    %vm151 = vcmp.lt.f32.partialorder %v150, 0.0004427343
    %v152 = vsel %vm151, %v149, %v146
    %v153 = vsel %vm140, %v133, %v152
    %v154 = vsel %vm139, %v153, %v133
    %155 = vst [vmem:[#allocation8] sm:$0xff] %v154
    // Predicated region
    $region34: #{tpu_custom_call.1} parent=1 // pred_check
      _
    $region35: #{tpu_custom_call.1} parent=1 // pred_check_branch
      %157 = sbr.rel (0) target = $region37
    $region36: #{tpu_custom_call.1} parent=1 // pred_region
      %159 = vsyncadd [#allocation4], 0
      %s161 = sshll.u32 [#allocation8], 4
      %s162 = int_to_ptr.vmem [resolvable:$true] %s161
      %s163 = sshll.u32 %s5, 4
      %s164 = int_to_ptr.hbm [resolvable:$true] %s163
      %166 = dma.vmem_to_hbm [thread:$0]  %s162, 128, %s164, [#allocation4]
    $region37: #{tpu_custom_call.1} parent=1 // pred_fallthru
      _
    // Predicated region
    $region38: #{tpu_custom_call.1} parent=1 // pred_check
      _
    $region39: #{tpu_custom_call.1} parent=1 // pred_check_branch
      %168 = sbr.rel (0) target = $region41
    $region40: #{tpu_custom_call.1} parent=1 // pred_region
      %170 = dma.done [#allocation4], 128
    $region41: #{tpu_custom_call.1} parent=1 // pred_fallthru
      _
    %171 = vsyncpa [#allocation3], 1
    %172 = vsyncpa [#allocation6], 1
    %173 = vsyncpa [#allocation4], 1

</llo_original>
